<compile_context>
chip_gen: v5e
topology: v5e:2x2
jax: 0.10.0
libtpu: 0.0.40
codegen_flags: <defaults>
</compile_context>

<pallas_src>
import functools

import jax
import jax.numpy as jnp
from jax.experimental import pallas as pl
from jax.experimental.pallas import tpu as pltpu

LANE = 128
SUBLANE = 8


def _round_up(n, m):
    return (n + m - 1) // m * m


def _fused_mlp_kernel(x_ref, w_ref, v_ref, o_ref, *, dims, eps):
    """Whole-MLP forward on one batch tile; activations stay in VMEM/vregs.

    x_ref: (TB, Dpad)        zero-padded input activations
    w_ref: (L, Dpad, Dpad)   zero-padded weights, pre-transposed [in, out]
    v_ref: (L, 8, Dpad)      rows: 0=bias, 1=gamma, 2=beta, 3=valid-lane mask
    o_ref: (TB, Dpad)        padded output (valid lanes = dims[-1], rest 0)
    """
    h = x_ref[...].astype(jnp.float32)
    n_layers = len(dims) - 1
    for l in range(n_layers):          # statically unrolled (L is a Python int)
        d_out = dims[l + 1]            # true (unpadded) feature width
        # TODO(synk): cast h / w to bf16 here for v6e/v7x MXU once widths scale;
        # keep the accumulator and the LayerNorm math in f32.
        z = jnp.dot(h, w_ref[l], preferred_element_type=jnp.float32)
        vec = v_ref[l]                                    # (8, Dpad)
        b, gamma, beta, mask = vec[0:1, :], vec[1:2, :], vec[2:3, :], vec[3:4, :]
        z = jnp.maximum(z + b, 0.0)                       # bias + ReLU
        # LayerNorm over the TRUE width: padded lanes of z are exactly 0
        # (zero-padded weight columns / bias), so a plain lane-sum divided by
        # d_out is the exact mean; the residual is masked so padded lanes do
        # not contribute to the variance.
        mean = jnp.sum(z, axis=-1, keepdims=True) * (1.0 / d_out)
        c = (z - mean) * mask
        var = jnp.sum(c * c, axis=-1, keepdims=True) * (1.0 / d_out)
        h = c * jax.lax.rsqrt(var + eps) * gamma + beta   # padded lanes -> 0
    o_ref[...] = h.astype(o_ref.dtype)


def pack_mlp_params(params, lane=LANE, dtype=jnp.float32):
    """Zero-pad every layer to a common lane-dense width and stack.

    params: list of (w [Din, Dout], b [Dout], gamma [Dout], beta [Dout]).
    Returns (W [L, Dpad, Dpad], V [L, 8, Dpad], dims tuple).
    """
    dims = [params[0][0].shape[0]] + [w.shape[1] for (w, _, _, _) in params]
    d_pad = _round_up(max(dims), lane)
    n_layers = len(params)
    W = jnp.zeros((n_layers, d_pad, d_pad), dtype)
    V = jnp.zeros((n_layers, SUBLANE, d_pad), dtype)
    for l, (w, b, g, bt) in enumerate(params):
        din, dout = w.shape
        W = W.at[l, :din, :dout].set(w.astype(dtype))
        V = V.at[l, 0, :dout].set(jnp.ravel(b).astype(dtype))
        V = V.at[l, 1, :dout].set(jnp.ravel(g).astype(dtype))
        V = V.at[l, 2, :dout].set(jnp.ravel(bt).astype(dtype))
        V = V.at[l, 3, :dout].set(1.0)                     # valid-lane mask
    return W, V, tuple(dims)


def mlp_forward(x, packed, *, eps=1e-5, tb=None):
    """Fused MLP forward. x: [B, dims[0]] -> [B, dims[-1]]."""
    W, V, dims = packed
    n_layers, d_pad, _ = W.shape
    B, d_in = x.shape
    assert d_in == dims[0]
    b_pad = _round_up(B, SUBLANE)
    if tb is None:
        tb = b_pad                      # small batches: single batch tile
    assert b_pad % tb == 0 and tb % SUBLANE == 0

    xp = jnp.zeros((b_pad, d_pad), x.dtype).at[:B, :d_in].set(x)

    out = pl.pallas_call(
        functools.partial(_fused_mlp_kernel, dims=dims, eps=eps),
        out_shape=jax.ShapeDtypeStruct((b_pad, d_pad), x.dtype),
        grid_spec=pltpu.PrefetchScalarGridSpec(
            num_scalar_prefetch=0,
            grid=(b_pad // tb,),
            in_specs=[
                pl.BlockSpec((tb, d_pad), lambda i: (i, 0)),
                # Grid-invariant operands (weights + packed vectors): whole
                # array per step; tiny footprint at these widths.
                pl.BlockSpec((n_layers, d_pad, d_pad), lambda i: (0, 0, 0)),
                pl.BlockSpec((n_layers, SUBLANE, d_pad), lambda i: (0, 0, 0)),
            ],
            out_specs=pl.BlockSpec((tb, d_pad), lambda i: (i, 0)),
        ),
        compiler_params=pltpu.CompilerParams(
            dimension_semantics=("parallel",)),
    )(xp, W, V)
    return out[:B, :dims[-1]]


def init_mlp_params(key, in_dim, sizes, dtype=jnp.float32):
    """Deterministic synthetic parameters for make_fc(in_dim, sizes) + LayerNorms."""
    params = []
    d_in = in_dim
    for d_out in sizes:
        key, kw, kb = jax.random.split(key, 3)
        bound = 1.0 / jnp.sqrt(jnp.array(d_in, dtype))
        # nn.Linear weight is [out, in]; store transposed [in, out] for the kernel.
        w = jax.random.uniform(kw, (d_in, d_out), dtype, -bound, bound)
        b = jax.random.uniform(kb, (d_out,), dtype, -bound, bound)
        gamma = jnp.ones((d_out,), dtype)    # nn.LayerNorm default weight
        beta = jnp.zeros((d_out,), dtype)    # nn.LayerNorm default bias
        params.append((w, b, gamma, beta))
        d_in = d_out
    return params


def mlp_forward_ref(x, params, eps=1e-5):
    """Pure-JAX reference (unpadded) for correctness checking."""
    for (w, b, g, bt) in params:
        h = jnp.maximum(x @ w + b, 0.0)
        mean = jnp.mean(h, axis=-1, keepdims=True)
        var = jnp.mean((h - mean) ** 2, axis=-1, keepdims=True)
        x = (h - mean) * jax.lax.rsqrt(var + eps) * g + bt
    return x


if __name__ == "__main__":
    key = jax.random.PRNGKey(0)
    batch = 8
    obs_dim = 32            # spaces.flatdim(env.observation_space)
    sizes = [64, 32]        # config['nn.sizes']

    kx, kp = jax.random.split(key)
    x = jax.random.normal(kx, (batch, obs_dim), jnp.float32)
    params = init_mlp_params(kp, obs_dim, sizes)
    packed = pack_mlp_params(params)

    out = mlp_forward(x, packed)
    out = jax.block_until_ready(out)

    ref = mlp_forward_ref(x, params)
    assert out.shape == (batch, sizes[-1])
    assert jnp.allclose(out, ref, atol=1e-5, rtol=1e-5)

    print("KERNEL_OK")
</pallas_src>

<mosaic_0001>
module attributes {stable_mosaic.version = 11 : i64} {
  func.func @_fused_mlp_kernel(%arg0: i32, %arg1: memref<8x128xf32, #tpu.memory_space<vmem>>, %arg2: memref<2x128x128xf32, #tpu.memory_space<vmem>>, %arg3: memref<2x8x128xf32, #tpu.memory_space<vmem>>, %arg4: memref<8x128xf32, #tpu.memory_space<vmem>>) attributes {dimension_semantics = [#tpu.dimension_semantics<parallel>], iteration_bounds = array<i64: 1>, scalar_prefetch = 0 : i64, scratch_operands = 0 : i64, tpu.core_type = #tpu.core_type<tc>, window_params = [{transform_indices = @transform_0, window_bounds = array<i64: 8, 128>}, {pipeline_mode = #tpu.pipeline_mode<synchronous>, transform_indices = @transform_1, window_bounds = array<i64: 2, 128, 128>}, {pipeline_mode = #tpu.pipeline_mode<synchronous>, transform_indices = @transform_2, window_bounds = array<i64: 2, 8, 128>}, {transform_indices = @transform_3, window_bounds = array<i64: 8, 128>}]} {
    %c0 = arith.constant 0 : index
    %c0_0 = arith.constant 0 : index
    %0 = vector.load %arg1[%c0, %c0_0] : memref<8x128xf32, #tpu.memory_space<vmem>>, vector<8x128xf32>
    %c0_1 = arith.constant 0 : index
    %c0_2 = arith.constant 0 : index
    %c0_3 = arith.constant 0 : index
    %1 = vector.load %arg2[%c0_1, %c0_2, %c0_3] : memref<2x128x128xf32, #tpu.memory_space<vmem>>, vector<1x128x128xf32>
    %2 = vector.shape_cast %1 : vector<1x128x128xf32> to vector<128x128xf32>
    %cst = arith.constant dense<0.000000e+00> : vector<8x128xf32>
    %3 = tpu.matmul %0, %2, %cst {dimension_numbers = #tpu.dot_dimension_numbers<[1], [0], [0], [1], [0, 0, 1, 1], [], []>} : vector<8x128xf32>, vector<128x128xf32>, vector<8x128xf32> -> vector<8x128xf32>
    %c0_4 = arith.constant 0 : index
    %c0_5 = arith.constant 0 : index
    %c0_6 = arith.constant 0 : index
    %4 = vector.load %arg3[%c0_4, %c0_5, %c0_6] : memref<2x8x128xf32, #tpu.memory_space<vmem>>, vector<1x8x128xf32>
    %5 = vector.shape_cast %4 : vector<1x8x128xf32> to vector<8x128xf32>
    %6 = vector.extract_strided_slice %5 {offsets = [0, 0], sizes = [1, 128], strides = [1, 1]} : vector<8x128xf32> to vector<1x128xf32>
    %7 = vector.extract_strided_slice %5 {offsets = [1, 0], sizes = [1, 128], strides = [1, 1]} : vector<8x128xf32> to vector<1x128xf32>
    %8 = vector.extract_strided_slice %5 {offsets = [2, 0], sizes = [1, 128], strides = [1, 1]} : vector<8x128xf32> to vector<1x128xf32>
    %9 = vector.extract_strided_slice %5 {offsets = [3, 0], sizes = [1, 128], strides = [1, 1]} : vector<8x128xf32> to vector<1x128xf32>
    %10 = vector.broadcast %6 : vector<1x128xf32> to vector<8x128xf32>
    %11 = arith.addf %3, %10 : vector<8x128xf32>
    %cst_7 = arith.constant 0.000000e+00 : f32
    %12 = vector.broadcast %cst_7 : f32 to vector<8x128xf32>
    %13 = arith.maximumf %11, %12 : vector<8x128xf32>
    %cst_8 = arith.constant dense<0.000000e+00> : vector<8xf32>
    %14 = vector.multi_reduction <add>, %13, %cst_8 [1] : vector<8x128xf32> to vector<8xf32>
    %15 = vector.shape_cast %14 : vector<8xf32> to vector<8x1xf32>
    %cst_9 = arith.constant 1.562500e-02 : f32
    %16 = vector.broadcast %cst_9 : f32 to vector<8x1xf32>
    %17 = arith.mulf %15, %16 : vector<8x1xf32>
    %18 = vector.broadcast %17 : vector<8x1xf32> to vector<8x128xf32>
    %19 = arith.subf %13, %18 : vector<8x128xf32>
    %20 = vector.broadcast %9 : vector<1x128xf32> to vector<8x128xf32>
    %21 = arith.mulf %19, %20 : vector<8x128xf32>
    %22 = arith.mulf %21, %21 : vector<8x128xf32>
    %cst_10 = arith.constant dense<0.000000e+00> : vector<8xf32>
    %23 = vector.multi_reduction <add>, %22, %cst_10 [1] : vector<8x128xf32> to vector<8xf32>
    %24 = vector.shape_cast %23 : vector<8xf32> to vector<8x1xf32>
    %cst_11 = arith.constant 1.562500e-02 : f32
    %25 = vector.broadcast %cst_11 : f32 to vector<8x1xf32>
    %26 = arith.mulf %24, %25 : vector<8x1xf32>
    %cst_12 = arith.constant 9.99999974E-6 : f32
    %27 = vector.broadcast %cst_12 : f32 to vector<8x1xf32>
    %28 = arith.addf %26, %27 : vector<8x1xf32>
    %29 = math.rsqrt %28 : vector<8x1xf32>
    %30 = vector.broadcast %29 : vector<8x1xf32> to vector<8x128xf32>
    %31 = arith.mulf %21, %30 : vector<8x128xf32>
    %32 = vector.broadcast %7 : vector<1x128xf32> to vector<8x128xf32>
    %33 = arith.mulf %31, %32 : vector<8x128xf32>
    %34 = vector.broadcast %8 : vector<1x128xf32> to vector<8x128xf32>
    %35 = arith.addf %33, %34 : vector<8x128xf32>
    %c1 = arith.constant 1 : index
    %c0_13 = arith.constant 0 : index
    %c0_14 = arith.constant 0 : index
    %36 = vector.load %arg2[%c1, %c0_13, %c0_14] : memref<2x128x128xf32, #tpu.memory_space<vmem>>, vector<1x128x128xf32>
    %37 = vector.shape_cast %36 : vector<1x128x128xf32> to vector<128x128xf32>
    %cst_15 = arith.constant dense<0.000000e+00> : vector<8x128xf32>
    %38 = tpu.matmul %35, %37, %cst_15 {dimension_numbers = #tpu.dot_dimension_numbers<[1], [0], [0], [1], [0, 0, 1, 1], [], []>} : vector<8x128xf32>, vector<128x128xf32>, vector<8x128xf32> -> vector<8x128xf32>
    %c1_16 = arith.constant 1 : index
    %c0_17 = arith.constant 0 : index
    %c0_18 = arith.constant 0 : index
    %39 = vector.load %arg3[%c1_16, %c0_17, %c0_18] : memref<2x8x128xf32, #tpu.memory_space<vmem>>, vector<1x8x128xf32>
    %40 = vector.shape_cast %39 : vector<1x8x128xf32> to vector<8x128xf32>
    %41 = vector.extract_strided_slice %40 {offsets = [0, 0], sizes = [1, 128], strides = [1, 1]} : vector<8x128xf32> to vector<1x128xf32>
    %42 = vector.extract_strided_slice %40 {offsets = [1, 0], sizes = [1, 128], strides = [1, 1]} : vector<8x128xf32> to vector<1x128xf32>
    %43 = vector.extract_strided_slice %40 {offsets = [2, 0], sizes = [1, 128], strides = [1, 1]} : vector<8x128xf32> to vector<1x128xf32>
    %44 = vector.extract_strided_slice %40 {offsets = [3, 0], sizes = [1, 128], strides = [1, 1]} : vector<8x128xf32> to vector<1x128xf32>
    %45 = vector.broadcast %41 : vector<1x128xf32> to vector<8x128xf32>
    %46 = arith.addf %38, %45 : vector<8x128xf32>
    %cst_19 = arith.constant 0.000000e+00 : f32
    %47 = vector.broadcast %cst_19 : f32 to vector<8x128xf32>
    %48 = arith.maximumf %46, %47 : vector<8x128xf32>
    %cst_20 = arith.constant dense<0.000000e+00> : vector<8xf32>
    %49 = vector.multi_reduction <add>, %48, %cst_20 [1] : vector<8x128xf32> to vector<8xf32>
    %50 = vector.shape_cast %49 : vector<8xf32> to vector<8x1xf32>
    %cst_21 = arith.constant 3.125000e-02 : f32
    %51 = vector.broadcast %cst_21 : f32 to vector<8x1xf32>
    %52 = arith.mulf %50, %51 : vector<8x1xf32>
    %53 = vector.broadcast %52 : vector<8x1xf32> to vector<8x128xf32>
    %54 = arith.subf %48, %53 : vector<8x128xf32>
    %55 = vector.broadcast %44 : vector<1x128xf32> to vector<8x128xf32>
    %56 = arith.mulf %54, %55 : vector<8x128xf32>
    %57 = arith.mulf %56, %56 : vector<8x128xf32>
    %cst_22 = arith.constant dense<0.000000e+00> : vector<8xf32>
    %58 = vector.multi_reduction <add>, %57, %cst_22 [1] : vector<8x128xf32> to vector<8xf32>
    %59 = vector.shape_cast %58 : vector<8xf32> to vector<8x1xf32>
    %cst_23 = arith.constant 3.125000e-02 : f32
    %60 = vector.broadcast %cst_23 : f32 to vector<8x1xf32>
    %61 = arith.mulf %59, %60 : vector<8x1xf32>
    %cst_24 = arith.constant 9.99999974E-6 : f32
    %62 = vector.broadcast %cst_24 : f32 to vector<8x1xf32>
    %63 = arith.addf %61, %62 : vector<8x1xf32>
    %64 = math.rsqrt %63 : vector<8x1xf32>
    %65 = vector.broadcast %64 : vector<8x1xf32> to vector<8x128xf32>
    %66 = arith.mulf %56, %65 : vector<8x128xf32>
    %67 = vector.broadcast %42 : vector<1x128xf32> to vector<8x128xf32>
    %68 = arith.mulf %66, %67 : vector<8x128xf32>
    %69 = vector.broadcast %43 : vector<1x128xf32> to vector<8x128xf32>
    %70 = arith.addf %68, %69 : vector<8x128xf32>
    %c0_25 = arith.constant 0 : index
    %c0_26 = arith.constant 0 : index
    %71 = vector.load %arg4[%c0_25, %c0_26] : memref<8x128xf32, #tpu.memory_space<vmem>>, vector<8x128xf32>
    tpu.vector_store %arg4[%c0_25, %c0_26], %70 {strides = array<i32>} : memref<8x128xf32, #tpu.memory_space<vmem>>, vector<8x128xf32>,
    return
  }
  func.func @transform_0(%arg0: i32) -> (i32, i32) {
    %c0_i32 = arith.constant 0 : i32
    %c0_i32_0 = arith.constant 0 : i32
    return %arg0, %c0_i32 : i32, i32
  }
  func.func @transform_1(%arg0: i32) -> (i32, i32, i32) {
    %c0_i32 = arith.constant 0 : i32
    %c0_i32_0 = arith.constant 0 : i32
    %c0_i32_1 = arith.constant 0 : i32
    %c0_i32_2 = arith.constant 0 : i32
    return %c0_i32, %c0_i32_0, %c0_i32_1 : i32, i32, i32
  }
  func.func @transform_2(%arg0: i32) -> (i32, i32, i32) {
    %c0_i32 = arith.constant 0 : i32
    %c0_i32_0 = arith.constant 0 : i32
    %c0_i32_1 = arith.constant 0 : i32
    %c0_i32_2 = arith.constant 0 : i32
    return %c0_i32, %c0_i32_0, %c0_i32_1 : i32, i32, i32
  }
  func.func @transform_3(%arg0: i32) -> (i32, i32) {
    %c0_i32 = arith.constant 0 : i32
    %c0_i32_0 = arith.constant 0 : i32
    return %arg0, %c0_i32 : i32, i32
  }
}

</mosaic_0001>

<llo_original>
// kernel: tpu_custom_call.1
$region0: #{tpu_custom_call.1}
  #allocation0 [shape = 'u32[]', space=smem, size = 0x4, offset = 0x4, fixed_abs, tag = 'smem constant byte address 0x4 - core index']
  #allocation1 [shape = 'u32[72,128]{1,0:T(1,128)}', space=vmem, size = 0x9000, scoped, tag = 'internal scratch']
  %s0 = inlined_call_operand.hbm [shape: f32[8,128], index: 0, kind: input, shape index: {}]
  %s1 = inlined_call_operand.hbm [shape: f32[2,128,128], index: 1, kind: input, shape index: {}]
  %s2 = inlined_call_operand.hbm [shape: f32[2,8,128], index: 2, kind: input, shape index: {}]
  %s3 = inlined_call_operand.hbm [shape: f32[8,128], index: 3, kind: output, shape index: {}]
  %s4 = sld [smem:[#allocation0]]
  $region34: #{tpu_custom_call.1} parent=0
    _
  %s6 = ssub.s32 1, %s4
  %s7 = scalar_select 0, %s6, %s4
  $region1: #{tpu_custom_call.1} parent=0
    #allocation2 [shape = 'u8[4096]{0}', space=vmem, size = 0x1000, scoped, tag = 'input window, operand 0, single buffered']
    #allocation3 [shape = 's32[1]{0}', space=sflag, size = 0x4, scoped, tag = 'scoped memory for tpu_custom_call.1']
    #allocation4 [shape = 's32[1]{0}', space=sflag, size = 0x4, scoped, tag = 'scoped memory for tpu_custom_call.1']
    #allocation5 [shape = 'u8[131072]{0}', space=vmem, size = 0x20000, scoped, tag = 'input window, operand 1, single buffered']
    #allocation6 [shape = 's32[1]{0}', space=sflag, size = 0x4, scoped, tag = 'scoped memory for tpu_custom_call.1']
    #allocation7 [shape = 'u8[8192]{0}', space=vmem, size = 0x2000, scoped, tag = 'input window, operand 2, single buffered']
    #allocation8 [shape = 'u8[4096]{0}', space=vmem, size = 0x1000, scoped, tag = 'output window, operand 0, single buffered']
    %8 = vsyncpa [#allocation3], 0
    %9 = vsyncpa [#allocation6], 0
    %10 = vsyncpa [#allocation4], 0
    // Predicated region
    $region2: #{tpu_custom_call.1} parent=1 // pred_check
      _
    $region3: #{tpu_custom_call.1} parent=1 // pred_check_branch
      %12 = sbr.rel (0) target = $region5
    $region4: #{tpu_custom_call.1} parent=1 // pred_region
      %14 = vsyncadd [#allocation3], 0
      %s16 = sshll.u32 %s0, 4
      %s17 = int_to_ptr.hbm [resolvable:$true] %s16
      %s18 = sshll.u32 [#allocation2], 4
      %s19 = int_to_ptr.vmem [resolvable:$true] %s18
      %21 = dma.hbm_to_vmem [thread:$0]  %s17, 128, %s19, [#allocation3]
    $region5: #{tpu_custom_call.1} parent=1 // pred_fallthru
      _
    // Predicated region
    $region6: #{tpu_custom_call.1} parent=1 // pred_check
      _
    $region7: #{tpu_custom_call.1} parent=1 // pred_check_branch
      %23 = sbr.rel (0) target = $region9
    $region8: #{tpu_custom_call.1} parent=1 // pred_region
      %25 = vsyncadd [#allocation6], 0
      %s26 = sshll.u32 %s1, 4
      %s27 = int_to_ptr.hbm [resolvable:$true] %s26
      %s28 = sshll.u32 [#allocation5], 4
      %s29 = int_to_ptr.vmem [resolvable:$true] %s28
      %34 = dma.hbm_to_vmem [thread:$0]  %s27, 4096, %s29, [#allocation6], 128, 128, 8
    $region9: #{tpu_custom_call.1} parent=1 // pred_fallthru
      _
    // Predicated region
    $region10: #{tpu_custom_call.1} parent=1 // pred_check
      _
    $region11: #{tpu_custom_call.1} parent=1 // pred_check_branch
      %36 = sbr.rel (0) target = $region13
    $region12: #{tpu_custom_call.1} parent=1 // pred_region
      %38 = vsyncadd [#allocation6], 0
      %s39 = sshll.u32 %s2, 4
      %s40 = int_to_ptr.hbm [resolvable:$true] %s39
      %s41 = sshll.u32 [#allocation7], 4
      %s42 = int_to_ptr.vmem [resolvable:$true] %s41
      %47 = dma.hbm_to_vmem [thread:$0]  %s40, 256, %s42, [#allocation6], 128, 128, 8
    $region13: #{tpu_custom_call.1} parent=1 // pred_fallthru
      _
    // Predicated region
    $region14: #{tpu_custom_call.1} parent=1 // pred_check
      _
    $region15: #{tpu_custom_call.1} parent=1 // pred_check_branch
      %49 = sbr.rel (0) target = $region17
    $region16: #{tpu_custom_call.1} parent=1 // pred_region
      %51 = dma.done [#allocation3], 128
    $region17: #{tpu_custom_call.1} parent=1 // pred_fallthru
      _
    // Predicated region
    $region18: #{tpu_custom_call.1} parent=1 // pred_check
      _
    $region19: #{tpu_custom_call.1} parent=1 // pred_check_branch
      %53 = sbr.rel (0) target = $region21
    $region20: #{tpu_custom_call.1} parent=1 // pred_region
      %55 = dma.done [#allocation6], 4096
    $region21: #{tpu_custom_call.1} parent=1 // pred_fallthru
      _
    // Predicated region
    $region22: #{tpu_custom_call.1} parent=1 // pred_check
      _
    $region23: #{tpu_custom_call.1} parent=1 // pred_check_branch
      %57 = sbr.rel (0) target = $region25
    $region24: #{tpu_custom_call.1} parent=1 // pred_region
      %59 = dma.done [#allocation6], 256
    $region25: #{tpu_custom_call.1} parent=1 // pred_fallthru
      _
    %v60 = vld [vmem:[#allocation2] sm:$0xff]
    %v61 = vld [vmem:[#allocation5] sm:$0xff]
    %v62 = vld [vmem:[#allocation5 + $0x8] sm:$0xff]
    %v63 = vld [vmem:[#allocation5 + $0x10] sm:$0xff]
    %v64 = vld [vmem:[#allocation5 + $0x18] sm:$0xff]
    %v65 = vld [vmem:[#allocation5 + $0x20] sm:$0xff]
    %v66 = vld [vmem:[#allocation5 + $0x28] sm:$0xff]
    %v67 = vld [vmem:[#allocation5 + $0x30] sm:$0xff]
    %v68 = vld [vmem:[#allocation5 + $0x38] sm:$0xff]
    %v69 = vld [vmem:[#allocation5 + $0x40] sm:$0xff]
    %v70 = vld [vmem:[#allocation5 + $0x48] sm:$0xff]
    %v71 = vld [vmem:[#allocation5 + $0x50] sm:$0xff]
    %v72 = vld [vmem:[#allocation5 + $0x58] sm:$0xff]
    %v73 = vld [vmem:[#allocation5 + $0x60] sm:$0xff]
    %v74 = vld [vmem:[#allocation5 + $0x68] sm:$0xff]
    %v75 = vld [vmem:[#allocation5 + $0x70] sm:$0xff]
    %v76 = vld [vmem:[#allocation5 + $0x78] sm:$0xff]
    %v77 = vld [vmem:[#allocation7] sm:$0xff]
    %v78 = vperm.slane %v77, 0
    %79 = vmatpush.msra.mxu0 %v76
    %80 = vmatpush.msra.mxu0 %v75
    %81 = vmatpush.msra.mxu0 %v74
    %82 = vmatpush.msra.mxu0 %v73
    %83 = vmatpush.msra.mxu0 %v72
    %84 = vmatpush.msra.mxu0 %v71
    %85 = vmatpush.msra.mxu0 %v70
    %86 = vmatpush.msra.mxu0 %v69
    %87 = vmatpush.msra.mxu0 %v68
    %88 = vmatpush.msra.mxu0 %v67
    %89 = vmatpush.msra.mxu0 %v66
    %90 = vmatpush.msra.mxu0 %v65
    %91 = vmatpush.msra.mxu0 %v64
    %92 = vmatpush.msra.mxu0 %v63
    %93 = vmatpush.msra.mxu0 %v62
    %94 = vmatpush.msra.mxu0 %v61
    %95 = vmatmul.f32.gmra.mxu0 %v60
    %v96 = vpop.f32.mrf.mxu0
    %v97 = vadd.f32 %v78, %v96
    %98 = vdwg.mxu0
    %v99 = vmax.f32 %v97, 0.0
    %100 = vadd.xlane.f32.xlu0 %v99
    %v101 = vpop.xlane.xlu0 %100
    %v102 = vmul.f32 %v101, 0.015625
    %v103 = vsub.f32 %v99, %v102
    %v104 = vperm.slane %v77, 3
    %v105 = vmul.f32 %v103, %v104
    %v106 = vmul.f32 %v105, %v105
    %107 = vadd.xlane.f32.xlu0 %v106
    %v108 = vpop.xlane.xlu0 %107
    %v109 = vmul.f32 %v108, 0.015625
    %v110 = vadd.f32 %v109, 1e-05
    %v111 = vrsqrt.pop %v110
    %v112 = vmul.f32 %v111, %v110
    %v113 = vmul.f32 %v112, %v111
    %v114 = vmul.f32 0.5, %v113
    %v115 = vsub.f32 1.5, %v114
    %v116 = vmul.f32 %v111, %v115
    %vm117 = vweird.f32 %v110
    %vm118 = vweird.f32 %v111
    %vm119 = vmor %vm117, %vm118
    %v120 = vsel %vm119, %v111, %v116
    %v121 = vmul.f32 %v105, %v120
    %v122 = vperm.slane %v77, 1
    %v123 = vmul.f32 %v121, %v122
    %v124 = vperm.slane %v77, 2
    %v125 = vadd.f32 %v123, %v124
    %s126 = scalar_lea.vmem [#allocation5], 128
    %v127 = vld [vmem:[%s126] sm:$0xff]
    %v128 = vld [vmem:[%s126 + $0x8] sm:$0xff]
    %v129 = vld [vmem:[%s126 + $0x10] sm:$0xff]
    %v130 = vld [vmem:[%s126 + $0x18] sm:$0xff]
    %v131 = vld [vmem:[%s126 + $0x20] sm:$0xff]
    %v132 = vld [vmem:[%s126 + $0x28] sm:$0xff]
    %v133 = vld [vmem:[%s126 + $0x30] sm:$0xff]
    %v134 = vld [vmem:[%s126 + $0x38] sm:$0xff]
    %v135 = vld [vmem:[%s126 + $0x40] sm:$0xff]
    %v136 = vld [vmem:[%s126 + $0x48] sm:$0xff]
    %v137 = vld [vmem:[%s126 + $0x50] sm:$0xff]
    %v138 = vld [vmem:[%s126 + $0x58] sm:$0xff]
    %v139 = vld [vmem:[%s126 + $0x60] sm:$0xff]
    %v140 = vld [vmem:[%s126 + $0x68] sm:$0xff]
    %v141 = vld [vmem:[%s126 + $0x70] sm:$0xff]
    %v142 = vld [vmem:[%s126 + $0x78] sm:$0xff]
    %s143 = scalar_lea.vmem [#allocation7], 8
    %v144 = vld [vmem:[%s143] sm:$0xff]
    %v145 = vperm.slane %v144, 0
    %146 = vmatpush.msra.mxu0 %v142
    %147 = vmatpush.msra.mxu0 %v141
    %148 = vmatpush.msra.mxu0 %v140
    %149 = vmatpush.msra.mxu0 %v139
    %150 = vmatpush.msra.mxu0 %v138
    %151 = vmatpush.msra.mxu0 %v137
    %152 = vmatpush.msra.mxu0 %v136
    %153 = vmatpush.msra.mxu0 %v135
    %154 = vmatpush.msra.mxu0 %v134
    %155 = vmatpush.msra.mxu0 %v133
    %156 = vmatpush.msra.mxu0 %v132
    %157 = vmatpush.msra.mxu0 %v131
    %158 = vmatpush.msra.mxu0 %v130
    %159 = vmatpush.msra.mxu0 %v129
    %160 = vmatpush.msra.mxu0 %v128
    %161 = vmatpush.msra.mxu0 %v127
    %162 = vmatmul.f32.gmra.mxu0 %v125
    %v163 = vpop.f32.mrf.mxu0
    %v164 = vadd.f32 %v145, %v163
    %165 = vdwg.mxu0
    %v166 = vmax.f32 %v164, 0.0
    %167 = vadd.xlane.f32.xlu0 %v166
    %v168 = vpop.xlane.xlu0 %167
    %v169 = vmul.f32 %v168, 0.03125
    %v170 = vsub.f32 %v166, %v169
    %v171 = vperm.slane %v144, 3
    %v172 = vmul.f32 %v170, %v171
    %v173 = vmul.f32 %v172, %v172
    %174 = vadd.xlane.f32.xlu0 %v173
    %v175 = vpop.xlane.xlu0 %174
    %v176 = vmul.f32 %v175, 0.03125
    %v177 = vadd.f32 %v176, 1e-05
    %v178 = vrsqrt.pop %v177
    %v179 = vmul.f32 %v178, %v177
    %v180 = vmul.f32 %v179, %v178
    %v181 = vmul.f32 0.5, %v180
    %v182 = vsub.f32 1.5, %v181
    %v183 = vmul.f32 %v178, %v182
    %vm184 = vweird.f32 %v177
    %vm185 = vweird.f32 %v178
    %vm186 = vmor %vm184, %vm185
    %v187 = vsel %vm186, %v178, %v183
    %v188 = vmul.f32 %v172, %v187
    %v189 = vperm.slane %v144, 1
    %v190 = vmul.f32 %v188, %v189
    %v191 = vperm.slane %v144, 2
    %v192 = vadd.f32 %v190, %v191
    %193 = vst [vmem:[#allocation8] sm:$0xff] %v192
    // Predicated region
    $region26: #{tpu_custom_call.1} parent=1 // pred_check
      _
    $region27: #{tpu_custom_call.1} parent=1 // pred_check_branch
      %195 = sbr.rel (0) target = $region29
    $region28: #{tpu_custom_call.1} parent=1 // pred_region
      %197 = vsyncadd [#allocation4], 0
      %s199 = sshll.u32 [#allocation8], 4
      %s200 = int_to_ptr.vmem [resolvable:$true] %s199
      %s201 = sshll.u32 %s3, 4
      %s202 = int_to_ptr.hbm [resolvable:$true] %s201
      %204 = dma.vmem_to_hbm [thread:$0]  %s200, 128, %s202, [#allocation4]
    $region29: #{tpu_custom_call.1} parent=1 // pred_fallthru
      _
    // Predicated region
    $region30: #{tpu_custom_call.1} parent=1 // pred_check
      _
    $region31: #{tpu_custom_call.1} parent=1 // pred_check_branch
      %206 = sbr.rel (0) target = $region33
    $region32: #{tpu_custom_call.1} parent=1 // pred_region
      %208 = dma.done [#allocation4], 128
    $region33: #{tpu_custom_call.1} parent=1 // pred_fallthru
      _
    %209 = vsyncpa [#allocation3], 1
    %210 = vsyncpa [#allocation6], 1
    %211 = vsyncpa [#allocation4], 1

</llo_original>
